<compile_context>
chip_gen: v7x
topology: tpu7x:2x2x1
jax: 0.10.0
libtpu: 0.0.40
codegen_flags: <defaults>
</compile_context>

<pallas_src>
import functools

import jax
import jax.numpy as jnp
from jax.experimental import pallas as pl
from jax.experimental.pallas import tpu as pltpu


def _focal_loss_kernel(logits_ref, tgt_ref, out_ref, *, gamma: float,
                       n_total: int, tile_n: int, sub_n: int,
                       needs_mask: bool, use_mxu_gather: bool):
    """Writes the focal-loss partial sum for one (tile_n, C) tile of rows."""
    i = pl.program_id(0)
    c = logits_ref.shape[1]
    n_sub = tile_n // sub_n
    in_dtype = logits_ref.dtype

    if use_mxu_gather:
        # (C, 128) all-ones RHS: lane-sum as a matvec on the otherwise idle
        # MXU; bf16 x bf16 -> f32 accumulation is exact for a one-hot row.
        ones_rhs = jnp.ones((c, 128), dtype=in_dtype)       # hoisted, once/step

    def sub_body(j, acc):
        start = j * sub_n
        if sub_n % 8 == 0:
            start = pl.multiple_of(start, 8)
        x = logits_ref[pl.ds(start, sub_n), :]               # (sub_n, C) native
        t = tgt_ref[pl.ds(start, sub_n), :]                  # (sub_n, 1) int32

        # row max in the native dtype (exact), stable log-sum-exp; only the
        # exp/sum/log run in f32 (sub-block-sized f32 temporaries only).
        m = jnp.max(x, axis=-1, keepdims=True).astype(jnp.float32)
        e = jnp.exp(x.astype(jnp.float32) - m)               # (sub_n, C) f32
        s = jnp.sum(e, axis=-1, keepdims=True)               # XLU lane reduce
        lse = m + jnp.log(s)

        # gather the target-class logit with a one-hot lane mask
        col = jax.lax.broadcasted_iota(jnp.int32, (sub_n, c), 1)
        hit = col == t
        if use_mxu_gather:
            masked = jnp.where(hit, x, jnp.zeros((), in_dtype))   # stays bf16
            tgt_logit = jax.lax.dot_general(
                masked, ones_rhs, (((1,), (0,)), ((), ())),
                preferred_element_type=jnp.float32)[:, :1]
        else:
            tgt_logit = jnp.sum(jnp.where(hit, x.astype(jnp.float32), 0.0),
                                axis=-1, keepdims=True)

        ce = lse - tgt_logit                                  # per-row CE

        # focal transform: (1 - exp(-ce))**gamma * ce * 10  (gamma is static)
        if gamma == 0.0:
            focal = ce * 10.0
        else:
            p = jnp.exp(-ce)
            base = 1.0 - p
            if float(gamma).is_integer() and 0.0 < gamma <= 8.0:
                w = base
                for _ in range(int(gamma) - 1):               # no extra exp/log
                    w = w * base
            else:
                base = jnp.clip(base, 0.0, 1.0)               # see semantics note
                w = base ** gamma
            focal = w * ce * 10.0

        if needs_mask:   # static gate: only emitted when n % tile_n != 0
            row = (jax.lax.broadcasted_iota(jnp.int32, (sub_n, 1), 0)
                   + (i * tile_n + j * sub_n))
            focal = jnp.where(row < n_total, focal, 0.0)

        return acc + focal

    acc = jax.lax.fori_loop(0, n_sub, sub_body,
                            jnp.zeros((sub_n, 1), jnp.float32),
                            unroll=n_sub <= 4)
    # lane-dense per-tile partial sum -> unmasked full-lane store
    out_ref[...] = jnp.full((1, 128), jnp.sum(acc), dtype=jnp.float32)


def _chip_vmem_budget():
    """Returns (dma_tile_target_bytes, vmem_limit_bytes), gated on chip VMEM."""
    vmem_cap = None
    try:
        vmem_cap = getattr(pltpu.get_tpu_info(), "vmem_capacity_bytes", None)
    except Exception:
        vmem_cap = None
    if vmem_cap is None:
        vmem_cap = 128 * 1024 * 1024
    if vmem_cap <= 64 * 1024 * 1024:                 # v7x-class: 64 MiB per TC
        return 5 * 1024 * 1024, 36 * 1024 * 1024
    return 8 * 1024 * 1024, 80 * 1024 * 1024          # v5e / v6e: 128 MiB


def focal_loss_pallas(logits: jax.Array, targets: jax.Array,
                      gamma: float = 0.0, *, tile_n: int | None = None,
                      sub_n: int | None = None):
    """logits: (N, C) float (f32 or bf16), targets: (N,) int class ids -> scalar."""
    assert gamma >= 0
    n, c = logits.shape
    itemsize = jnp.dtype(logits.dtype).itemsize
    tile_target, vmem_limit = _chip_vmem_budget()

    # DMA tile: as big as the (double-buffered) budget allows
    if tile_n is None:
        tile_n = max(8, tile_target // max(1, c * itemsize))
    tile_n = int(min(tile_n, n))
    if tile_n < n:
        tile_n = max(8, (tile_n // 8) * 8)            # sublane-aligned tiles

    # in-kernel compute sub-block: keeps the tile-sized f32/iota/select
    # temporaries bounded (~<= 4 MiB) independently of the DMA tile size
    if sub_n is None:
        sub_n = max(8, min(512, (256 * 1024) // max(1, c)))
        sub_n = max(8, (sub_n // 8) * 8)
    sub_n = int(min(sub_n, tile_n))
    if tile_n % sub_n != 0:
        tile_n = max(sub_n, (tile_n // sub_n) * sub_n)

    num_tiles = (n + tile_n - 1) // tile_n
    needs_mask = (n % tile_n) != 0
    use_mxu_gather = (logits.dtype == jnp.bfloat16) and (c <= 4096)

    tgt2d = targets.astype(jnp.int32).reshape(n, 1)

    kernel = functools.partial(
        _focal_loss_kernel, gamma=float(gamma), n_total=n, tile_n=tile_n,
        sub_n=sub_n, needs_mask=needs_mask, use_mxu_gather=use_mxu_gather)

    cost = pl.CostEstimate(
        flops=8 * n * c,
        transcendentals=n * c + 2 * n,
        bytes_accessed=n * c * itemsize + n * 4 + num_tiles * 128 * 4,
    )

    partials = pl.pallas_call(
        kernel,
        out_shape=jax.ShapeDtypeStruct((num_tiles, 128), jnp.float32),
        grid=(num_tiles,),
        in_specs=[
            pl.BlockSpec((tile_n, c), lambda i: (i, 0)),
            pl.BlockSpec((tile_n, 1), lambda i: (i, 0)),
        ],
        out_specs=pl.BlockSpec((1, 128), lambda i: (i, 0)),
        compiler_params=pltpu.CompilerParams(
            dimension_semantics=("parallel",),   # no carried state: both v7x TCs
            vmem_limit_bytes=vmem_limit,
        ),
        cost_estimate=cost,
    )(logits, tgt2d)

    # tiny final reduce + mean in plain JAX
    return jnp.sum(partials[:, 0]) * (1.0 / n)


def focal_loss_ref(logits, targets, gamma):
    """Pure-JAX reference mirroring torch F.cross_entropy(reduction='none') + focal_loss."""
    logp = jax.nn.log_softmax(logits.astype(jnp.float32), axis=-1)
    ce = -jnp.take_along_axis(logp, targets[:, None].astype(jnp.int32), axis=-1)[:, 0]
    p = jnp.exp(-ce)
    return jnp.mean((1.0 - p) ** gamma * ce * 10.0)


if __name__ == "__main__":
    key = jax.random.PRNGKey(0)
    k1, k2, k3, k4 = jax.random.split(key, 4)

    # small case: single tile, N not a multiple of 8
    N, C = 10, 32
    logits = jax.random.normal(k1, (N, C), dtype=jnp.float32)
    targets = jax.random.randint(k2, (N,), 0, C, dtype=jnp.int32)

    for gamma in (0.0, 2.0, 0.5):                      # skip / int / non-int paths
        out = jax.block_until_ready(focal_loss_pallas(logits, targets, gamma=gamma))
        ref = focal_loss_ref(logits, targets, gamma)
        assert jnp.allclose(out, ref, rtol=1e-5, atol=1e-5), (gamma, out, ref)

    # multi-tile pipelined case with in-kernel sub-block chunking
    # (tile_n=16, sub_n=8 -> fori_loop trip count 2; 3 grid steps, last partial)
    N2, C2 = 40, 128
    logits2 = jax.random.normal(k3, (N2, C2), dtype=jnp.float32)
    targets2 = jax.random.randint(k4, (N2,), 0, C2, dtype=jnp.int32)
    out2 = jax.block_until_ready(
        focal_loss_pallas(logits2, targets2, gamma=2.0, tile_n=16, sub_n=8))
    ref2 = focal_loss_ref(logits2, targets2, 2.0)
    assert jnp.allclose(out2, ref2, rtol=1e-5, atol=1e-5), (out2, ref2)

    # bf16 inputs streamed as bf16 (no wrapper pre-cast): bf16 max/select plus
    # the MXU one-hot target-gather path
    logits_bf16 = logits2.astype(jnp.bfloat16)
    out3 = jax.block_until_ready(
        focal_loss_pallas(logits_bf16, targets2, gamma=2.0, tile_n=16, sub_n=8))
    ref3 = focal_loss_ref(logits_bf16, targets2, 2.0)
    assert jnp.allclose(out3, ref3, rtol=1e-4, atol=1e-4), (out3, ref3)

    print("KERNEL_OK")
</pallas_src>

<mosaic_0001>
module attributes {stable_mosaic.version = 11 : i64} {
  func.func @_focal_loss_kernel(%arg0: i32, %arg1: memref<10x32xf32, #tpu.memory_space<vmem>>, %arg2: memref<10x1xi32, #tpu.memory_space<vmem>>, %arg3: memref<1x128xf32, #tpu.memory_space<vmem>>) attributes {dimension_semantics = [#tpu.dimension_semantics<parallel>], iteration_bounds = array<i64: 1>, scalar_prefetch = 0 : i64, scratch_operands = 0 : i64, tpu.core_type = #tpu.core_type<tc>, window_params = [{transform_indices = @transform_0, window_bounds = array<i64: 10, 32>}, {transform_indices = @transform_1, window_bounds = array<i64: 10, 1>}, {transform_indices = @transform_2, window_bounds = array<i64: 1, 128>}]} {
    %cst = arith.constant 0.000000e+00 : f32
    %0 = vector.broadcast %cst : f32 to vector<10x1xf32>
    %c0_i32 = arith.constant 0 : i32
    %c10_i32 = arith.constant 10 : i32
    %1 = arith.muli %c0_i32, %c10_i32 : i32
    %2 = arith.index_cast %1 : i32 to index
    %c0 = arith.constant 0 : index
    %3 = vector.load %arg1[%2, %c0] : memref<10x32xf32, #tpu.memory_space<vmem>>, vector<10x32xf32>
    %4 = arith.index_cast %1 : i32 to index
    %c0_0 = arith.constant 0 : index
    %5 = vector.load %arg2[%4, %c0_0] : memref<10x1xi32, #tpu.memory_space<vmem>>, vector<10x1xi32>
    %cst_1 = arith.constant dense<0xFF800000> : vector<10xf32>
    %6 = vector.multi_reduction <maximumf>, %3, %cst_1 [1] : vector<10x32xf32> to vector<10xf32>
    %7 = vector.shape_cast %6 : vector<10xf32> to vector<10x1xf32>
    %8 = vector.broadcast %7 : vector<10x1xf32> to vector<10x32xf32>
    %9 = arith.subf %3, %8 : vector<10x32xf32>
    %10 = math.exp %9 : vector<10x32xf32>
    %cst_2 = arith.constant dense<0.000000e+00> : vector<10xf32>
    %11 = vector.multi_reduction <add>, %10, %cst_2 [1] : vector<10x32xf32> to vector<10xf32>
    %12 = vector.shape_cast %11 : vector<10xf32> to vector<10x1xf32>
    %13 = math.log %12 : vector<10x1xf32>
    %14 = arith.addf %7, %13 : vector<10x1xf32>
    %15 = tpu.iota {dimensions = array<i32: 1>} : vector<10x32xi32>
    %16 = vector.broadcast %5 : vector<10x1xi32> to vector<10x32xi32>
    %17 = arith.cmpi eq, %15, %16 : vector<10x32xi32>
    %cst_3 = arith.constant 0.000000e+00 : f32
    %18 = vector.broadcast %cst_3 : f32 to vector<10x32xf32>
    %19 = arith.select %17, %3, %18 : vector<10x32xi1>, vector<10x32xf32>
    %cst_4 = arith.constant dense<0.000000e+00> : vector<10xf32>
    %20 = vector.multi_reduction <add>, %19, %cst_4 [1] : vector<10x32xf32> to vector<10xf32>
    %21 = vector.shape_cast %20 : vector<10xf32> to vector<10x1xf32>
    %22 = arith.subf %14, %21 : vector<10x1xf32>
    %cst_5 = arith.constant 1.000000e+01 : f32
    %23 = vector.broadcast %cst_5 : f32 to vector<10x1xf32>
    %24 = arith.mulf %22, %23 : vector<10x1xf32>
    %25 = arith.addf %0, %24 : vector<10x1xf32>
    %c1_i32 = arith.constant 1 : i32
    %26 = vector.shape_cast %25 : vector<10x1xf32> to vector<1x10x1xf32>
    %cst_6 = arith.constant dense<0.000000e+00> : vector<1xf32>
    %27 = vector.multi_reduction <add>, %26, %cst_6 [1, 2] : vector<1x10x1xf32> to vector<1xf32>
    %28 = vector.shape_cast %27 : vector<1xf32> to vector<1x1x1xf32>
    %29 = vector.extract %28[0, 0, 0] : f32 from vector<1x1x1xf32>
    %30 = vector.broadcast %29 : f32 to vector<1x128xf32>
    %c0_7 = arith.constant 0 : index
    %c0_8 = arith.constant 0 : index
    %31 = vector.load %arg3[%c0_7, %c0_8] : memref<1x128xf32, #tpu.memory_space<vmem>>, vector<1x128xf32>
    tpu.vector_store %arg3[%c0_7, %c0_8], %30 {strides = array<i32>} : memref<1x128xf32, #tpu.memory_space<vmem>>, vector<1x128xf32>,
    return
  }
  func.func @transform_0(%arg0: i32) -> (i32, i32) {
    %c0_i32 = arith.constant 0 : i32
    %c0_i32_0 = arith.constant 0 : i32
    return %arg0, %c0_i32 : i32, i32
  }
  func.func @transform_1(%arg0: i32) -> (i32, i32) {
    %c0_i32 = arith.constant 0 : i32
    %c0_i32_0 = arith.constant 0 : i32
    return %arg0, %c0_i32 : i32, i32
  }
  func.func @transform_2(%arg0: i32) -> (i32, i32) {
    %c0_i32 = arith.constant 0 : i32
    %c0_i32_0 = arith.constant 0 : i32
    return %arg0, %c0_i32 : i32, i32
  }
}

</mosaic_0001>

<llo_original>
// kernel: tpu_custom_call.1
$region0: #{tpu_custom_call.1}
  #allocation0 [shape = 'u32[]', space=smem, size = 0x4, offset = 0x4, fixed_abs, tag = 'smem constant byte address 0x4 - core index']
  #allocation1 [shape = 'u32[144,128]{1,0:T(1,128)}', space=vmem, size = 0x12000, scoped, tag = 'internal scratch']
  %s0 = inlined_call_operand.hbm [shape: f32[10,32], index: 0, kind: input, shape index: {}]
  %s1 = inlined_call_operand.hbm [shape: s32[10,1], index: 1, kind: input, shape index: {}]
  %s2 = inlined_call_operand.hbm [shape: f32[1,128], index: 2, kind: output, shape index: {}]
  %s3 = sld [smem:[#allocation0]]
  $region26: #{tpu_custom_call.1} parent=0
    _
  %s5 = ssub.s32 1, %s3
  %s6 = scalar_select 0, %s5, %s3
  $region1: #{tpu_custom_call.1} parent=0
    #allocation2 [shape = 'u8[8192]{0}', space=vmem, size = 0x2000, scoped, tag = 'input window, operand 0, single buffered']
    #allocation3 [shape = 's32[1]{0}', space=sflag, size = 0x4, scoped, tag = 'scoped memory for tpu_custom_call.1']
    #allocation4 [shape = 's32[1]{0}', space=sflag, size = 0x4, scoped, tag = 'scoped memory for tpu_custom_call.1']
    #allocation5 [shape = 'u8[8192]{0}', space=vmem, size = 0x2000, scoped, tag = 'input window, operand 1, single buffered']
    #allocation6 [shape = 's32[1]{0}', space=sflag, size = 0x4, scoped, tag = 'scoped memory for tpu_custom_call.1']
    #allocation7 [shape = 'u8[512]{0}', space=vmem, size = 0x400, scoped, tag = 'output window, operand 0, single buffered']
    %7 = vsyncpa [#allocation3], 0
    %8 = vsyncpa [#allocation6], 0
    %9 = vsyncpa [#allocation4], 0
    // Predicated region
    $region2: #{tpu_custom_call.1} parent=1 // pred_check
      _
    $region3: #{tpu_custom_call.1} parent=1 // pred_check_branch
      %11 = sbr.rel (0) target = $region5
    $region4: #{tpu_custom_call.1} parent=1 // pred_region
      %s13 = ssub.s32 256, 256
      %14 = vsyncadd [#allocation3], %s13
      %s15 = sshll.u32 [#allocation2], 4
      %s16 = int_to_ptr.vmem [resolvable:$true] %s15
      %21 = dma.hbm_to_vmem [thread:$0]  %s0, 256, %s16, [#allocation3], 128, 128, 8
    $region5: #{tpu_custom_call.1} parent=1 // pred_fallthru
      _
    // Predicated region
    $region6: #{tpu_custom_call.1} parent=1 // pred_check
      _
    $region7: #{tpu_custom_call.1} parent=1 // pred_check_branch
      %23 = sbr.rel (0) target = $region9
    $region8: #{tpu_custom_call.1} parent=1 // pred_region
      %s25 = ssub.s32 256, 256
      %26 = vsyncadd [#allocation6], %s25
      %s27 = sshll.u32 [#allocation5], 4
      %s28 = int_to_ptr.vmem [resolvable:$true] %s27
      %33 = dma.hbm_to_vmem [thread:$0]  %s1, 256, %s28, [#allocation6], 128, 128, 8
    $region9: #{tpu_custom_call.1} parent=1 // pred_fallthru
      _
    // Predicated region
    $region10: #{tpu_custom_call.1} parent=1 // pred_check
      _
    $region11: #{tpu_custom_call.1} parent=1 // pred_check_branch
      %35 = sbr.rel (0) target = $region13
    $region12: #{tpu_custom_call.1} parent=1 // pred_region
      %36 = dma.done [#allocation3], 256
    $region13: #{tpu_custom_call.1} parent=1 // pred_fallthru
      _
    // Predicated region
    $region14: #{tpu_custom_call.1} parent=1 // pred_check
      _
    $region15: #{tpu_custom_call.1} parent=1 // pred_check_branch
      %38 = sbr.rel (0) target = $region17
    $region16: #{tpu_custom_call.1} parent=1 // pred_region
      %39 = dma.done [#allocation6], 256
    $region17: #{tpu_custom_call.1} parent=1 // pred_fallthru
      _
    %v40 = vld [vmem:[#allocation2] sm:$0xff]
    %v41 = vld [vmem:[#allocation2 + $0x8] sm:$0x3]
    %v42 = vld [vmem:[#allocation5] sm:$0xff]
    %v43 = vld [vmem:[#allocation5 + $0x8] sm:$0x3]
    %vm44 = vcmask 261120
    %v45 = vsel %vm44, %v40, -inf
    %46 = vmax.xlane.f32.xlu0 %v45
    %v47 = vpop.xlane.xlu0 %46
    %vm48 = vcmask 254976
    %v49 = vsel %vm48, %v41, -inf
    %50 = vmax.xlane.f32.xlu0 %v49
    %v51 = vpop.xlane.xlu0 %50
    %v52 = vsub.f32 %v40, %v47
    %v53 = vsub.f32 %v41, %v51
    %v54 = vmul.f32 %v52, 1.442695
    %v55 = vpow.pop %v54
    %v56 = vmul.f32 %v53, 1.442695
    %v57 = vpow.pop %v56
    %v58 = vsel %vm44, %v55, 0.0
    %59 = vadd.xlane.f32.xlu0 %v58
    %v60 = vpop.xlane.xlu0 %59
    %v61 = vsel %vm48, %v57, 0.0
    %62 = vadd.xlane.f32.xlu0 %v61
    %v63 = vpop.xlane.xlu0 %62
    %v64 = vlog2.pop %v60
    %v65 = vmul.f32 %v64, 0.6931472
    %v66 = vlog2.pop %v63
    %v67 = vmul.f32 %v66, 0.6931472
    %v68 = vadd.f32 %v47, %v65
    %v69 = vadd.f32 %v51, %v67
    %v70 = vlaneseq
    %v71 = vand.u32 %v70, 127
    %72 = vset.pattern.permute.xlu0 0
    %73 = vperm.xlu0 %72, %v42
    %v74 = vpop.permute.xlu0 %73
    %75 = vset.pattern.permute.xlu0 0
    %76 = vperm.xlu0 %75, %v43
    %v77 = vpop.permute.xlu0 %76
    %vm78 = vcmp.eq.s32.totalorder %v71, %v74
    %vm79 = vcmp.eq.s32.totalorder %v71, %v77
    %v80 = vsel %vm78, %v40, 0.0
    %v81 = vsel %vm79, %v41, 0.0
    %v82 = vsel %vm44, %v80, 0.0
    %83 = vadd.xlane.f32.xlu0 %v82
    %v84 = vpop.xlane.xlu0 %83
    %v85 = vsel %vm48, %v81, 0.0
    %86 = vadd.xlane.f32.xlu0 %v85
    %v87 = vpop.xlane.xlu0 %86
    %v88 = vsub.f32 %v68, %v84
    %v89 = vsub.f32 %v69, %v87
    %v90 = vmul.f32 %v88, 10.0
    %v91 = vmul.f32 %v89, 10.0
    %v92 = vadd.f32 %v90, 0.0
    %v93 = vadd.f32 %v91, 0.0
    %vm94 = vcmask 7168
    %v95 = vsel %vm94, %v92, 0.0
    %vm96 = vcmask 1024
    %v97 = vsel %vm96, %v93, 0.0
    %v98 = vadd.f32 %v95, %v97
    %99 = vadd.xlane.f32.xlu0 %v98
    %v100 = vpop.xlane.xlu0 %99
    %v101 = vrot.slane %v100, 4
    %v102 = vadd.f32 %v100, %v101
    %v103 = vrot.slane %v102, 2
    %v104 = vadd.f32 %v102, %v103
    %v105 = vrot.slane %v104, 1
    %v106 = vadd.f32 %v104, %v105
    %s107 = vtos %v106
    %v108 = vstv %s107
    %109 = vst [vmem:[#allocation7] sm:$0x1] %v108
    // Predicated region
    $region18: #{tpu_custom_call.1} parent=1 // pred_check
      _
    $region19: #{tpu_custom_call.1} parent=1 // pred_check_branch
      %111 = sbr.rel (0) target = $region21
    $region20: #{tpu_custom_call.1} parent=1 // pred_region
      %s113 = ssub.s32 16, 16
      %114 = vsyncadd [#allocation4], %s113
      %s116 = sshll.u32 [#allocation7], 4
      %s117 = int_to_ptr.vmem [resolvable:$true] %s116
      %119 = dma.vmem_to_hbm [thread:$0]  %s117, 16, %s2, [#allocation4]
    $region21: #{tpu_custom_call.1} parent=1 // pred_fallthru
      _
    // Predicated region
    $region22: #{tpu_custom_call.1} parent=1 // pred_check
      _
    $region23: #{tpu_custom_call.1} parent=1 // pred_check_branch
      %121 = sbr.rel (0) target = $region25
    $region24: #{tpu_custom_call.1} parent=1 // pred_region
      %122 = dma.done [#allocation4], 16
    $region25: #{tpu_custom_call.1} parent=1 // pred_fallthru
      _
    %123 = vsyncpa [#allocation3], 1
    %124 = vsyncpa [#allocation6], 1
    %125 = vsyncpa [#allocation4], 1

</llo_original>
